<compile_context>
chip_gen: v7x
topology: tpu7x:2x2x1
jax: 0.10.0
libtpu: 0.0.40
codegen_flags: <defaults>
</compile_context>

<pallas_src>
import jax
import jax.numpy as jnp
from jax.experimental import pallas as pl
from jax.experimental.pallas import tpu as pltpu

EMBED_DIM = 60
HIDDEN = 128
VOCAB = 64
VOCAB_PAD = 128        # lane-dense padded vocab (counts width, W1 rows, output lanes)
CONTEXT_LEN = 4
MAX_TB = 256           # max batch rows per grid step


def cbow_kernel(idx_ref, w1_ref, b1_ref, w2_ref, b2_ref, out_ref):
    """One batch tile of TB contexts.

    idx_ref : (TB, CONTEXT_LEN) int32 context ids (VMEM tile)
    w1_ref  : (VOCAB_PAD, HIDDEN)  fused emb @ W_proj.T, zero rows for pad ids
    b1_ref  : (1, HIDDEN)
    w2_ref  : (HIDDEN, VOCAB_PAD)  W_out.T zero-padded on the lane axis
    b2_ref  : (1, VOCAB_PAD)       b_out padded with -1e30
    out_ref : (TB, VOCAB_PAD)      log-probs (padded lanes garbage, sliced off)
    """
    tb = out_ref.shape[0]
    ids = idx_ref[...]                                        # (TB, 4) int32

    # counts[r, v] = #{i : ids[r, i] == v}; CONTEXT_LEN vector passes.
    col = jax.lax.broadcasted_iota(jnp.int32, (tb, VOCAB_PAD), 1)
    counts = jnp.zeros((tb, VOCAB_PAD), jnp.float32)
    for i in range(CONTEXT_LEN):                              # 4, fully unrolled
        counts = counts + (ids[:, i:i + 1] == col).astype(jnp.float32)

    # Fused embedding-sum + projection: counts @ (emb @ W_proj.T) + b_proj.
    h = jnp.dot(counts, w1_ref[...],
                preferred_element_type=jnp.float32) + b1_ref[...]
    h = jnp.maximum(h, 0.0)                                   # (TB, HIDDEN)

    # Output linear (lane-dense, padded vocab).
    logits = jnp.dot(h, w2_ref[...],
                     preferred_element_type=jnp.float32) + b2_ref[...]

    # Stable log_softmax; padded lanes hold -1e30 so they never win the max
    # and their exp underflows to exactly 0.
    m = jnp.max(logits, axis=-1, keepdims=True)
    shifted = logits - m
    lse = jnp.log(jnp.sum(jnp.exp(shifted), axis=-1, keepdims=True))
    out_ref[...] = shifted - lse


def prepare_cbow_params(emb, w_proj, b_proj, w_out, b_out):
    """One-time precompute: fuse embedding into proj, transpose, pad.

    Hoisted off the per-call path; returns VMEM-friendly f32 weights.
    """
    w1 = jnp.zeros((VOCAB_PAD, HIDDEN), jnp.float32)
    w1 = w1.at[:VOCAB, :].set(jnp.asarray(emb @ w_proj.T, jnp.float32))
    b1 = jnp.asarray(b_proj, jnp.float32).reshape(1, HIDDEN)
    w2 = jnp.zeros((HIDDEN, VOCAB_PAD), jnp.float32)
    w2 = w2.at[:, :VOCAB].set(jnp.asarray(w_out.T, jnp.float32))
    b2 = jnp.full((1, VOCAB_PAD), -1e30, jnp.float32)
    b2 = b2.at[0, :VOCAB].set(jnp.asarray(b_out, jnp.float32))
    return w1, b1, w2, b2


def _round_up(x, m):
    return ((x + m - 1) // m) * m


def _pick_tb(batch):
    """Batch-tile size: big enough to amortize per-step overhead, but keep
    the grid >= 2 tiles when possible so v7x can shard across both TCs."""
    b8 = _round_up(batch, 8)          # f32 sublane multiple
    if b8 >= 2 * MAX_TB:
        return MAX_TB
    if b8 >= 16:
        return _round_up((b8 + 1) // 2, 8)   # two tiles
    return b8                          # tiny batch: single tile


@jax.jit
def cbow_forward(idx_batch, w1, b1, w2, b2):
    """idx_batch: (B, CONTEXT_LEN) int32 context ids.  Returns (B, VOCAB)."""
    batch = idx_batch.shape[0]
    tb = _pick_tb(batch)
    padded = _round_up(batch, tb)
    idx = idx_batch.astype(jnp.int32)
    if padded != batch:
        idx = jnp.pad(idx, ((0, padded - batch), (0, 0)))     # id 0 pad rows

    out_pad = pl.pallas_call(
        cbow_kernel,
        out_shape=jax.ShapeDtypeStruct((padded, VOCAB_PAD), jnp.float32),
        grid_spec=pltpu.PrefetchScalarGridSpec(
            num_scalar_prefetch=0,
            grid=(padded // tb,),
            in_specs=[
                # Per-tile context ids (VMEM).
                pl.BlockSpec((tb, CONTEXT_LEN), lambda b: (b, 0)),
                # Weights: constant block index -> loaded once, resident in
                # VMEM across all grid steps.
                pl.BlockSpec((VOCAB_PAD, HIDDEN), lambda b: (0, 0)),
                pl.BlockSpec((1, HIDDEN), lambda b: (0, 0)),
                pl.BlockSpec((HIDDEN, VOCAB_PAD), lambda b: (0, 0)),
                pl.BlockSpec((1, VOCAB_PAD), lambda b: (0, 0)),
            ],
            out_specs=pl.BlockSpec((tb, VOCAB_PAD), lambda b: (b, 0)),
        ),
        compiler_params=pltpu.CompilerParams(
            dimension_semantics=("parallel",)),   # shard batch tiles on v7x
    )(idx, w1, b1, w2, b2)

    # Slice inside the same jit region so XLA fuses it with any consumer.
    return out_pad[:batch, :VOCAB]


def cbow_reference(idx_batch, emb, w_proj, b_proj, w_out, b_out):
    embeds = jnp.sum(emb[idx_batch], axis=1)             # (B, EMBED_DIM)
    h = jnp.maximum(embeds @ w_proj.T + b_proj, 0.0)     # (B, HIDDEN)
    logits = h @ w_out.T + b_out                         # (B, VOCAB)
    return jax.nn.log_softmax(logits, axis=-1)


if __name__ == "__main__":
    key = jax.random.PRNGKey(0)
    k_emb, k_w1, k_b1, k_w2, k_b2, k_idx = jax.random.split(key, 6)

    # Deterministic parameter init (shapes per nn.Embedding / nn.Linear).
    emb = jax.random.normal(k_emb, (VOCAB, EMBED_DIM), jnp.float32)
    w_proj = jax.random.uniform(k_w1, (HIDDEN, EMBED_DIM), jnp.float32,
                                -1.0 / EMBED_DIM ** 0.5, 1.0 / EMBED_DIM ** 0.5)
    b_proj = jax.random.uniform(k_b1, (HIDDEN,), jnp.float32,
                                -1.0 / EMBED_DIM ** 0.5, 1.0 / EMBED_DIM ** 0.5)
    w_out = jax.random.uniform(k_w2, (VOCAB, HIDDEN), jnp.float32,
                               -1.0 / HIDDEN ** 0.5, 1.0 / HIDDEN ** 0.5)
    b_out = jax.random.uniform(k_b2, (VOCAB,), jnp.float32,
                               -1.0 / HIDDEN ** 0.5, 1.0 / HIDDEN ** 0.5)

    # Small batch of context windows (B=16 -> two grid steps of TB=8).
    B = 16
    idx_batch = jax.random.randint(k_idx, (B, CONTEXT_LEN), 0, VOCAB, jnp.int32)

    # One-time weight prep (fusion / transpose / padding hoisted).
    w1, b1, w2, b2 = prepare_cbow_params(emb, w_proj, b_proj, w_out, b_out)
    w1, b1, w2, b2 = jax.block_until_ready((w1, b1, w2, b2))

    out = cbow_forward(idx_batch, w1, b1, w2, b2)
    out = jax.block_until_ready(out)

    ref = cbow_reference(idx_batch, emb, w_proj, b_proj, w_out, b_out)
    assert out.shape == (B, VOCAB)
    assert jnp.allclose(out, ref, atol=2e-4, rtol=2e-4)

    print("KERNEL_OK")
</pallas_src>

<mosaic_0001>
module attributes {stable_mosaic.version = 11 : i64} {
  func.func @cbow_kernel(%arg0: i32, %arg1: memref<8x4xi32, #tpu.memory_space<vmem>>, %arg2: memref<128x128xf32, #tpu.memory_space<vmem>>, %arg3: memref<1x128xf32, #tpu.memory_space<vmem>>, %arg4: memref<128x128xf32, #tpu.memory_space<vmem>>, %arg5: memref<1x128xf32, #tpu.memory_space<vmem>>, %arg6: memref<8x128xf32, #tpu.memory_space<vmem>>) attributes {dimension_semantics = [#tpu.dimension_semantics<parallel>], iteration_bounds = array<i64: 2>, scalar_prefetch = 0 : i64, scratch_operands = 0 : i64, tpu.core_type = #tpu.core_type<tc>, window_params = [{transform_indices = @transform_0, window_bounds = array<i64: 8, 4>}, {pipeline_mode = #tpu.pipeline_mode<synchronous>, transform_indices = @transform_1, window_bounds = array<i64: 128, 128>}, {pipeline_mode = #tpu.pipeline_mode<synchronous>, transform_indices = @transform_2, window_bounds = array<i64: 1, 128>}, {pipeline_mode = #tpu.pipeline_mode<synchronous>, transform_indices = @transform_3, window_bounds = array<i64: 128, 128>}, {pipeline_mode = #tpu.pipeline_mode<synchronous>, transform_indices = @transform_4, window_bounds = array<i64: 1, 128>}, {transform_indices = @transform_5, window_bounds = array<i64: 8, 128>}]} {
    %c0 = arith.constant 0 : index
    %c0_0 = arith.constant 0 : index
    %0 = vector.load %arg1[%c0, %c0_0] : memref<8x4xi32, #tpu.memory_space<vmem>>, vector<8x4xi32>
    %1 = tpu.iota {dimensions = array<i32: 1>} : vector<8x128xi32>
    %cst = arith.constant 0.000000e+00 : f32
    %2 = vector.broadcast %cst : f32 to vector<8x128xf32>
    %3 = vector.extract_strided_slice %0 {offsets = [0, 0], sizes = [8, 1], strides = [1, 1]} : vector<8x4xi32> to vector<8x1xi32>
    %4 = vector.broadcast %3 : vector<8x1xi32> to vector<8x128xi32>
    %5 = arith.cmpi eq, %4, %1 : vector<8x128xi32>
    %6 = arith.extui %5 : vector<8x128xi1> to vector<8x128xi32>
    %7 = arith.sitofp %6 : vector<8x128xi32> to vector<8x128xf32>
    %8 = arith.addf %2, %7 : vector<8x128xf32>
    %9 = vector.extract_strided_slice %0 {offsets = [0, 1], sizes = [8, 1], strides = [1, 1]} : vector<8x4xi32> to vector<8x1xi32>
    %10 = vector.broadcast %9 : vector<8x1xi32> to vector<8x128xi32>
    %11 = arith.cmpi eq, %10, %1 : vector<8x128xi32>
    %12 = arith.extui %11 : vector<8x128xi1> to vector<8x128xi32>
    %13 = arith.sitofp %12 : vector<8x128xi32> to vector<8x128xf32>
    %14 = arith.addf %8, %13 : vector<8x128xf32>
    %15 = vector.extract_strided_slice %0 {offsets = [0, 2], sizes = [8, 1], strides = [1, 1]} : vector<8x4xi32> to vector<8x1xi32>
    %16 = vector.broadcast %15 : vector<8x1xi32> to vector<8x128xi32>
    %17 = arith.cmpi eq, %16, %1 : vector<8x128xi32>
    %18 = arith.extui %17 : vector<8x128xi1> to vector<8x128xi32>
    %19 = arith.sitofp %18 : vector<8x128xi32> to vector<8x128xf32>
    %20 = arith.addf %14, %19 : vector<8x128xf32>
    %21 = vector.extract_strided_slice %0 {offsets = [0, 3], sizes = [8, 1], strides = [1, 1]} : vector<8x4xi32> to vector<8x1xi32>
    %22 = vector.broadcast %21 : vector<8x1xi32> to vector<8x128xi32>
    %23 = arith.cmpi eq, %22, %1 : vector<8x128xi32>
    %24 = arith.extui %23 : vector<8x128xi1> to vector<8x128xi32>
    %25 = arith.sitofp %24 : vector<8x128xi32> to vector<8x128xf32>
    %26 = arith.addf %20, %25 : vector<8x128xf32>
    %c0_1 = arith.constant 0 : index
    %c0_2 = arith.constant 0 : index
    %27 = vector.load %arg2[%c0_1, %c0_2] : memref<128x128xf32, #tpu.memory_space<vmem>>, vector<128x128xf32>
    %cst_3 = arith.constant dense<0.000000e+00> : vector<8x128xf32>
    %28 = tpu.matmul %26, %27, %cst_3 {dimension_numbers = #tpu.dot_dimension_numbers<[1], [0], [0], [1], [0, 0, 1, 1], [], []>} : vector<8x128xf32>, vector<128x128xf32>, vector<8x128xf32> -> vector<8x128xf32>
    %c0_4 = arith.constant 0 : index
    %c0_5 = arith.constant 0 : index
    %29 = vector.load %arg3[%c0_4, %c0_5] : memref<1x128xf32, #tpu.memory_space<vmem>>, vector<1x128xf32>
    %30 = vector.broadcast %29 : vector<1x128xf32> to vector<8x128xf32>
    %31 = arith.addf %28, %30 : vector<8x128xf32>
    %cst_6 = arith.constant 0.000000e+00 : f32
    %32 = vector.broadcast %cst_6 : f32 to vector<8x128xf32>
    %33 = arith.maximumf %31, %32 : vector<8x128xf32>
    %c0_7 = arith.constant 0 : index
    %c0_8 = arith.constant 0 : index
    %34 = vector.load %arg4[%c0_7, %c0_8] : memref<128x128xf32, #tpu.memory_space<vmem>>, vector<128x128xf32>
    %cst_9 = arith.constant dense<0.000000e+00> : vector<8x128xf32>
    %35 = tpu.matmul %33, %34, %cst_9 {dimension_numbers = #tpu.dot_dimension_numbers<[1], [0], [0], [1], [0, 0, 1, 1], [], []>} : vector<8x128xf32>, vector<128x128xf32>, vector<8x128xf32> -> vector<8x128xf32>
    %c0_10 = arith.constant 0 : index
    %c0_11 = arith.constant 0 : index
    %36 = vector.load %arg5[%c0_10, %c0_11] : memref<1x128xf32, #tpu.memory_space<vmem>>, vector<1x128xf32>
    %37 = vector.broadcast %36 : vector<1x128xf32> to vector<8x128xf32>
    %38 = arith.addf %35, %37 : vector<8x128xf32>
    %cst_12 = arith.constant dense<0xFF800000> : vector<8xf32>
    %39 = vector.multi_reduction <maximumf>, %38, %cst_12 [1] : vector<8x128xf32> to vector<8xf32>
    %40 = vector.shape_cast %39 : vector<8xf32> to vector<8x1xf32>
    %41 = vector.broadcast %40 : vector<8x1xf32> to vector<8x128xf32>
    %42 = arith.subf %38, %41 : vector<8x128xf32>
    %43 = math.exp %42 : vector<8x128xf32>
    %cst_13 = arith.constant dense<0.000000e+00> : vector<8xf32>
    %44 = vector.multi_reduction <add>, %43, %cst_13 [1] : vector<8x128xf32> to vector<8xf32>
    %45 = vector.shape_cast %44 : vector<8xf32> to vector<8x1xf32>
    %46 = math.log %45 : vector<8x1xf32>
    %47 = vector.broadcast %46 : vector<8x1xf32> to vector<8x128xf32>
    %48 = arith.subf %42, %47 : vector<8x128xf32>
    %c0_14 = arith.constant 0 : index
    %c0_15 = arith.constant 0 : index
    %49 = vector.load %arg6[%c0_14, %c0_15] : memref<8x128xf32, #tpu.memory_space<vmem>>, vector<8x128xf32>
    tpu.vector_store %arg6[%c0_14, %c0_15], %48 {strides = array<i32>} : memref<8x128xf32, #tpu.memory_space<vmem>>, vector<8x128xf32>,
    return
  }
  func.func @transform_0(%arg0: i32) -> (i32, i32) {
    %c0_i32 = arith.constant 0 : i32
    %c0_i32_0 = arith.constant 0 : i32
    return %arg0, %c0_i32 : i32, i32
  }
  func.func @transform_1(%arg0: i32) -> (i32, i32) {
    %c0_i32 = arith.constant 0 : i32
    %c0_i32_0 = arith.constant 0 : i32
    %c0_i32_1 = arith.constant 0 : i32
    return %c0_i32, %c0_i32_0 : i32, i32
  }
  func.func @transform_2(%arg0: i32) -> (i32, i32) {
    %c0_i32 = arith.constant 0 : i32
    %c0_i32_0 = arith.constant 0 : i32
    %c0_i32_1 = arith.constant 0 : i32
    return %c0_i32, %c0_i32_0 : i32, i32
  }
  func.func @transform_3(%arg0: i32) -> (i32, i32) {
    %c0_i32 = arith.constant 0 : i32
    %c0_i32_0 = arith.constant 0 : i32
    %c0_i32_1 = arith.constant 0 : i32
    return %c0_i32, %c0_i32_0 : i32, i32
  }
  func.func @transform_4(%arg0: i32) -> (i32, i32) {
    %c0_i32 = arith.constant 0 : i32
    %c0_i32_0 = arith.constant 0 : i32
    %c0_i32_1 = arith.constant 0 : i32
    return %c0_i32, %c0_i32_0 : i32, i32
  }
  func.func @transform_5(%arg0: i32) -> (i32, i32) {
    %c0_i32 = arith.constant 0 : i32
    %c0_i32_0 = arith.constant 0 : i32
    return %arg0, %c0_i32 : i32, i32
  }
}

</mosaic_0001>

<llo_original>
// kernel: cbow_forward.1
$region0: #{cbow_forward.1}
  #allocation0 [shape = 'u32[]', space=smem, size = 0x4, offset = 0x4, fixed_abs, tag = 'smem constant byte address 0x4 - core index']
  #allocation1 [shape = 'u32[144,128]{1,0:T(1,128)}', space=vmem, size = 0x12000, scoped, tag = 'internal scratch']
  %s0 = inlined_call_operand.vmem [shape: s32[16,4], index: 0, kind: input, shape index: {}]
  %s1 = inlined_call_operand.hbm [shape: f32[128,128], index: 1, kind: input, shape index: {}]
  %s2 = inlined_call_operand.vmem [shape: f32[1,128], index: 2, kind: input, shape index: {}]
  %s3 = inlined_call_operand.hbm [shape: f32[128,128], index: 3, kind: input, shape index: {}]
  %s4 = inlined_call_operand.vmem [shape: f32[1,128], index: 4, kind: input, shape index: {}]
  %s5 = inlined_call_operand.hbm [shape: f32[16,128], index: 5, kind: output, shape index: {}]
  %s6 = sld [smem:[#allocation0]]
  $region61: #{cbow_forward.1} parent=0
    _
  %s8 = ssub.s32 1, %s6
  %s9 = scalar_select 0, %s8, %s6
  $region1: #{cbow_forward.1} parent=0
    #allocation2 [shape = 'u8[65536]{0}', space=vmem, size = 0x10000, scoped, tag = 'input window, operand 1, single buffered']
    #allocation3 [shape = 's32[2]{0}', space=sflag, size = 0x8, scoped, tag = 'scoped memory for cbow_forward.1']
    #allocation4 [shape = 's32[2]{0}', space=sflag, size = 0x8, scoped, tag = 'scoped memory for cbow_forward.1']
    #allocation5 [shape = 'u8[65536]{0}', space=vmem, size = 0x10000, scoped, tag = 'input window, operand 3, single buffered']
    #allocation6 [shape = 's32[1]{0}', space=sflag, size = 0x4, scoped, tag = 'scoped memory for cbow_forward.1']
    #allocation7 [shape = 'u8[8192]{0}', space=vmem, size = 0x2000, scoped, tag = 'output window, operand 0']
    %10 = vsyncpa [#allocation3], 0
    %11 = vsyncpa [#allocation6], 0
    %12 = vsyncpa [#allocation4], 0
    %s13 = scalar_lea.sflag [#allocation4], 1
    %14 = vsyncpa %s13, 0
    loop: start=0, step=1, limit=4
    $region2: #{cbow_forward.1} parent=1 // loop_pre_header
      _
    $region3: #{cbow_forward.1} parent=1 // loop_header
      %s16 = sphi 0, %s20
      %p17 = scmp.ge.s32.totalorder %s16, 4
      %s26 = sphi 0, %s28
      %s29 = sphi 0, %s26
      %s30 = sphi 0, %s29
      %s46 = sphi 0, %s30
      %s50 = sphi 0, %s50
      %s52 = sphi 0, %s50
      %s53 = sphi 0, %s52
      %s67 = sphi 0, %s53
      %s71 = sphi 0, %s71
      %s73 = sphi 0, %s71
      %s74 = sphi 0, %s73
      %s88 = sphi 0, %s74
      %s92 = sphi 0, %s92
      %s94 = sphi 0, %s92
      %s95 = sphi 0, %s94
      %s109 = sphi 0, %s95
      %s113 = sphi 0, %s113
      %s115 = sphi 0, %s113
      %s116 = sphi 0, %s115
      %s130 = sphi 0, %s116
      %s136 = sphi 0, %s138
      %s139 = sphi 0, %s136
      %s140 = sphi 0, %s139
      %s156 = sphi 0, %s140
    $region4: #{cbow_forward.1} parent=1 // loop_header_branch
      %19 = sbr.rel (%p17) target = $region8
    $region5: #{cbow_forward.1} parent=1 // loop_body
      %s21 = ssub.s32 %s16, 1
      %s22 = ssub.s32 %s16, 2
      %s23 = sadd.s32 %s16, 1
      %s24 = ssub.s32 %s16, %s23
      %p25 = scmp.eq.s32.totalorder %s24, 0
      %s27 = sadd.s32 %s26, 1
      %s28 = scalar_select %p25, %s26, %s27
      %p31 = pneg %p25
      %p32 = scmp.eq.s32.totalorder %s16, 1
      %p33 = por %p31, %p32
      %p34 = scmp.ne.s32.totalorder %s26, %s29
      %p35 = scmp.eq.s32.totalorder %s16, 0
      %p36 = por %p34, %p35
      %p37 = scmp.ne.s32.totalorder %s26, %s29
      %p38 = scmp.eq.s32.totalorder %s21, 1
      %p39 = por %p37, %p38
      %p40 = scmp.ne.s32.totalorder %s29, %s30
      %p41 = scmp.eq.s32.totalorder %s21, 0
      %p42 = por %p40, %p41
      %p43 = scmp.ne.s32.totalorder %s29, %s30
      %p44 = scmp.eq.s32.totalorder %s22, 1
      %p45 = por %p43, %p44
      %p47 = scmp.ne.s32.totalorder %s30, %s46
      %p48 = scmp.eq.s32.totalorder %s22, 0
      %p49 = por %p47, %p48
      %s51 = sadd.s32 %s50, 1
      %p54 = scmp.eq.s32.totalorder %s16, 1
      %p55 = scmp.ne.s32.totalorder %s50, %s52
      %p56 = scmp.eq.s32.totalorder %s16, 0
      %p57 = por %p55, %p56
      %p58 = scmp.ne.s32.totalorder %s50, %s52
      %p59 = scmp.eq.s32.totalorder %s21, 1
      %p60 = por %p58, %p59
      %p61 = scmp.ne.s32.totalorder %s52, %s53
      %p62 = scmp.eq.s32.totalorder %s21, 0
      %p63 = por %p61, %p62
      %p64 = scmp.ne.s32.totalorder %s52, %s53
      %p65 = scmp.eq.s32.totalorder %s22, 1
      %p66 = por %p64, %p65
      %p68 = scmp.ne.s32.totalorder %s53, %s67
      %p69 = scmp.eq.s32.totalorder %s22, 0
      %p70 = por %p68, %p69
      %s72 = sadd.s32 %s71, 1
      %p75 = scmp.eq.s32.totalorder %s16, 1
      %p76 = scmp.ne.s32.totalorder %s71, %s73
      %p77 = scmp.eq.s32.totalorder %s16, 0
      %p78 = por %p76, %p77
      %p79 = scmp.ne.s32.totalorder %s71, %s73
      %p80 = scmp.eq.s32.totalorder %s21, 1
      %p81 = por %p79, %p80
      %p82 = scmp.ne.s32.totalorder %s73, %s74
      %p83 = scmp.eq.s32.totalorder %s21, 0
      %p84 = por %p82, %p83
      %p85 = scmp.ne.s32.totalorder %s73, %s74
      %p86 = scmp.eq.s32.totalorder %s22, 1
      %p87 = por %p85, %p86
      %p89 = scmp.ne.s32.totalorder %s74, %s88
      %p90 = scmp.eq.s32.totalorder %s22, 0
      %p91 = por %p89, %p90
      %s93 = sadd.s32 %s92, 1
      %p96 = scmp.eq.s32.totalorder %s16, 1
      %p97 = scmp.ne.s32.totalorder %s92, %s94
      %p98 = scmp.eq.s32.totalorder %s16, 0
      %p99 = por %p97, %p98
      %p100 = scmp.ne.s32.totalorder %s92, %s94
      %p101 = scmp.eq.s32.totalorder %s21, 1
      %p102 = por %p100, %p101
      %p103 = scmp.ne.s32.totalorder %s94, %s95
      %p104 = scmp.eq.s32.totalorder %s21, 0
      %p105 = por %p103, %p104
      %p106 = scmp.ne.s32.totalorder %s94, %s95
      %p107 = scmp.eq.s32.totalorder %s22, 1
      %p108 = por %p106, %p107
      %p110 = scmp.ne.s32.totalorder %s95, %s109
      %p111 = scmp.eq.s32.totalorder %s22, 0
      %p112 = por %p110, %p111
      %s114 = sadd.s32 %s113, 1
      %p117 = scmp.eq.s32.totalorder %s16, 1
      %p118 = scmp.ne.s32.totalorder %s113, %s115
      %p119 = scmp.eq.s32.totalorder %s16, 0
      %p120 = por %p118, %p119
      %p121 = scmp.ne.s32.totalorder %s113, %s115
      %p122 = scmp.eq.s32.totalorder %s21, 1
      %p123 = por %p121, %p122
      %p124 = scmp.ne.s32.totalorder %s115, %s116
      %p125 = scmp.eq.s32.totalorder %s21, 0
      %p126 = por %p124, %p125
      %p127 = scmp.ne.s32.totalorder %s115, %s116
      %p128 = scmp.eq.s32.totalorder %s22, 1
      %p129 = por %p127, %p128
      %p131 = scmp.ne.s32.totalorder %s116, %s130
      %p132 = scmp.eq.s32.totalorder %s22, 0
      %p133 = por %p131, %p132
      %s134 = ssub.s32 %s16, %s23
      %p135 = scmp.eq.s32.totalorder %s134, 0
      %s137 = sadd.s32 %s136, 1
      %s138 = scalar_select %p135, %s136, %s137
      %p141 = pneg %p135
      %p142 = scmp.eq.s32.totalorder %s16, 1
      %p143 = por %p141, %p142
      %p144 = scmp.ne.s32.totalorder %s136, %s139
      %p145 = scmp.eq.s32.totalorder %s16, 0
      %p146 = por %p144, %p145
      %p147 = scmp.ne.s32.totalorder %s136, %s139
      %p148 = scmp.eq.s32.totalorder %s21, 1
      %p149 = por %p147, %p148
      %p150 = scmp.ne.s32.totalorder %s139, %s140
      %p151 = scmp.eq.s32.totalorder %s21, 0
      %p152 = por %p150, %p151
      %p153 = scmp.ne.s32.totalorder %s139, %s140
      %p154 = scmp.eq.s32.totalorder %s22, 1
      %p155 = por %p153, %p154
      %p157 = scmp.ne.s32.totalorder %s140, %s156
      %p158 = scmp.eq.s32.totalorder %s22, 0
      %p159 = por %p157, %p158
      %p160 = scmp.le.s32.totalorder 1, %s16
      %p161 = scmp.lt.s32.totalorder %s16, 3
      %p162 = pnand %p160, %p161
      %p163 = pneg %p162
      // Predicated region
      $region9: #{cbow_forward.1} parent=5 // pred_check
        _
      $region10: #{cbow_forward.1} parent=5 // pred_check_branch
        %165 = sbr.rel (%p162) target = $region12
      $region11: #{cbow_forward.1} parent=5 // pred_region
        %s166 = ssub.s32 %s16, 1
        // Predicated region
        $region13: #{cbow_forward.1} parent=11 // pred_check
          %p167 = pneg %p63
        $region14: #{cbow_forward.1} parent=11 // pred_check_branch
          %169 = sbr.rel (%p167) target = $region16
        $region15: #{cbow_forward.1} parent=11 // pred_region
          %s171 = ssub.s32 2048, 2048
          %172 = vsyncadd [#allocation3], %s171
          %s173 = sshll.u32 [#allocation2], 4
          %s174 = int_to_ptr.vmem [resolvable:$true] %s173
          %179 = dma.hbm_to_vmem [thread:$0]  %s1, 2048, %s174, [#allocation3], 128, 128, 8
        $region16: #{cbow_forward.1} parent=11 // pred_fallthru
          _
        // Predicated region
        $region17: #{cbow_forward.1} parent=11 // pred_check
          %p180 = pneg %p84
        $region18: #{cbow_forward.1} parent=11 // pred_check_branch
          %182 = sbr.rel (%p180) target = $region20
        $region19: #{cbow_forward.1} parent=11 // pred_region
          _
        $region20: #{cbow_forward.1} parent=11 // pred_fallthru
          _
        // Predicated region
        $region21: #{cbow_forward.1} parent=11 // pred_check
          %p183 = pneg %p105
        $region22: #{cbow_forward.1} parent=11 // pred_check_branch
          %185 = sbr.rel (%p183) target = $region24
        $region23: #{cbow_forward.1} parent=11 // pred_region
          %s187 = ssub.s32 2048, 2048
          %188 = vsyncadd [#allocation6], %s187
          %s189 = sshll.u32 [#allocation5], 4
          %s190 = int_to_ptr.vmem [resolvable:$true] %s189
          %195 = dma.hbm_to_vmem [thread:$0]  %s3, 2048, %s190, [#allocation6], 128, 128, 8
        $region24: #{cbow_forward.1} parent=11 // pred_fallthru
          _
        // Predicated region
        $region25: #{cbow_forward.1} parent=11 // pred_check
          %p196 = pneg %p126
        $region26: #{cbow_forward.1} parent=11 // pred_check_branch
          %198 = sbr.rel (%p196) target = $region28
        $region27: #{cbow_forward.1} parent=11 // pred_region
          _
        $region28: #{cbow_forward.1} parent=11 // pred_fallthru
          _
      $region12: #{cbow_forward.1} parent=5 // pred_fallthru
        _
      %p199 = scmp.lt.s32.totalorder %s16, 2
      // Predicated region
      $region29: #{cbow_forward.1} parent=5 // pred_check
        %p200 = pneg %p199
      $region30: #{cbow_forward.1} parent=5 // pred_check_branch
        %202 = sbr.rel (%p200) target = $region32
      $region31: #{cbow_forward.1} parent=5 // pred_region
        // Predicated region
        $region33: #{cbow_forward.1} parent=31 // pred_check
          %p203 = pneg %p36
        $region34: #{cbow_forward.1} parent=31 // pred_check_branch
          %205 = sbr.rel (%p203) target = $region36
        $region35: #{cbow_forward.1} parent=31 // pred_region
          %p206 = scmp.lt.s32.totalorder %s16, 1
          %s207 = scalar_select %p206, %s16, 1
          %s208 = smul.addr %s207, 8
          %s209 = scalar_lea.vmem %s0, %s208
        $region36: #{cbow_forward.1} parent=31 // pred_fallthru
          _
      $region32: #{cbow_forward.1} parent=5 // pred_fallthru
        _
      %p210 = scmp.le.s32.totalorder 1, %s16
      %p211 = scmp.lt.s32.totalorder %s16, 3
      %p212 = pnand %p210, %p211
      %p213 = pneg %p212
      // Predicated region
      $region37: #{cbow_forward.1} parent=5 // pred_check
        _
      $region38: #{cbow_forward.1} parent=5 // pred_check_branch
        %215 = sbr.rel (%p212) target = $region40
      $region39: #{cbow_forward.1} parent=5 // pred_region
        %s216 = ssub.s32 %s16, 1
        // Predicated region
        $region41: #{cbow_forward.1} parent=39 // pred_check
          %p217 = pneg %p63
        $region42: #{cbow_forward.1} parent=39 // pred_check_branch
          %219 = sbr.rel (%p217) target = $region44
        $region43: #{cbow_forward.1} parent=39 // pred_region
          %220 = dma.done [#allocation3], 2048
        $region44: #{cbow_forward.1} parent=39 // pred_fallthru
          _
        // Predicated region
        $region45: #{cbow_forward.1} parent=39 // pred_check
          %p221 = pneg %p105
        $region46: #{cbow_forward.1} parent=39 // pred_check_branch
          %223 = sbr.rel (%p221) target = $region48
        $region47: #{cbow_forward.1} parent=39 // pred_region
          %224 = dma.done [#allocation6], 2048
        $region48: #{cbow_forward.1} parent=39 // pred_fallthru
          _
        %p225 = scmp.lt.s32.totalorder %s21, 1
        %s226 = scalar_select %p225, %s21, 1
        %s227 = smul.addr %s226, 8
        %s228 = scalar_lea.vmem %s0, %s227
        %p229 = pneg %p42
        %p230 = pneg %p39
        %p231 = pneg %p63
        %p232 = pneg %p60
        %p233 = pneg %p84
        %p234 = pneg %p81
        %p235 = pneg %p105
        %p236 = pneg %p102
        %p237 = pneg %p126
        %p238 = pneg %p123
        %p239 = pneg %p152
        %p240 = pneg %p149
        %s241 = sand.u32 %s139, 1
        %s242 = scalar_lea.sflag [#allocation4], %s241
        %s243 = sand.u32 %s139, 1
        %s244 = smul.addr %s243, 8
        %s245 = scalar_lea.vmem [#allocation7], %s244
        %p246 = scmp.lt.s32.totalorder %s21, 1
        %s247 = scalar_select %p246, %s21, 1
        %s248 = smul.addr %s247, 8
        %s249 = scalar_lea.vmem %s0, %s248
        %v250 = vld [vmem:[%s249] sm:$0xff]
        %v251 = vlaneseq
        %v252 = vand.u32 %v251, 127
        %253 = vset.pattern.permute.xlu0 0
        %254 = vperm.xlu0 %253, %v250
        %v255 = vpop.permute.xlu0 %254
        %vm256 = vcmp.eq.s32.totalorder %v255, %v252
        %v257 = vsel %vm256, 1, 0
        %v258 = vcvt.s32.f32 %v257
        %v259 = vadd.f32 %v258, 0.0
        %260 = vset.pattern.permute.xlu0 1
        %261 = vperm.xlu0 %260, %v250
        %v262 = vpop.permute.xlu0 %261
        %vm263 = vcmp.eq.s32.totalorder %v262, %v252
        %v264 = vsel %vm263, 1, 0
        %v265 = vcvt.s32.f32 %v264
        %v266 = vadd.f32 %v259, %v265
        %267 = vset.pattern.permute.xlu0 2
        %268 = vperm.xlu0 %267, %v250
        %v269 = vpop.permute.xlu0 %268
        %vm270 = vcmp.eq.s32.totalorder %v269, %v252
        %v271 = vsel %vm270, 1, 0
        %v272 = vcvt.s32.f32 %v271
        %v273 = vadd.f32 %v266, %v272
        %274 = vset.pattern.permute.xlu0 3
        %275 = vperm.xlu0 %274, %v250
        %v276 = vpop.permute.xlu0 %275
        %vm277 = vcmp.eq.s32.totalorder %v276, %v252
        %v278 = vsel %vm277, 1, 0
        %v279 = vcvt.s32.f32 %v278
        %v280 = vadd.f32 %v273, %v279
        %v281 = vld [vmem:[#allocation2] sm:$0xff]
        %v282 = vld [vmem:[#allocation2 + $0x8] sm:$0xff]
        %v283 = vld [vmem:[#allocation2 + $0x10] sm:$0xff]
        %v284 = vld [vmem:[#allocation2 + $0x18] sm:$0xff]
        %v285 = vld [vmem:[#allocation2 + $0x20] sm:$0xff]
        %v286 = vld [vmem:[#allocation2 + $0x28] sm:$0xff]
        %v287 = vld [vmem:[#allocation2 + $0x30] sm:$0xff]
        %v288 = vld [vmem:[#allocation2 + $0x38] sm:$0xff]
        %v289 = vld [vmem:[#allocation2 + $0x40] sm:$0xff]
        %v290 = vld [vmem:[#allocation2 + $0x48] sm:$0xff]
        %v291 = vld [vmem:[#allocation2 + $0x50] sm:$0xff]
        %v292 = vld [vmem:[#allocation2 + $0x58] sm:$0xff]
        %v293 = vld [vmem:[#allocation2 + $0x60] sm:$0xff]
        %v294 = vld [vmem:[#allocation2 + $0x68] sm:$0xff]
        %v295 = vld [vmem:[#allocation2 + $0x70] sm:$0xff]
        %v296 = vld [vmem:[#allocation2 + $0x78] sm:$0xff]
        %v297 = vld [vmem:[%s2] sm:$0x1]
        %v299 = vlaneseq
        %v300 = vshrl.u32 %v299, 7
        %v301 = vsub.s32 0, %v300
        %v302 = vrot.slane %v297, %v301
        %304 = vmatprep.subr.mxu0 0.0
        %305 = vmatpush1.msra.mxu0 %v281
        %306 = vmatprep.subr.mxu0 0.0
        %307 = vmatpush1.msra.mxu0 %v282
        %308 = vmatprep.subr.mxu0 0.0
        %309 = vmatpush1.msra.mxu0 %v283
        %310 = vmatprep.subr.mxu0 0.0
        %311 = vmatpush1.msra.mxu0 %v284
        %312 = vmatprep.subr.mxu0 0.0
        %313 = vmatpush1.msra.mxu0 %v285
        %314 = vmatprep.subr.mxu0 0.0
        %315 = vmatpush1.msra.mxu0 %v286
        %316 = vmatprep.subr.mxu0 0.0
        %317 = vmatpush1.msra.mxu0 %v287
        %318 = vmatprep.subr.mxu0 0.0
        %319 = vmatpush1.msra.mxu0 %v288
        %320 = vmatprep.subr.mxu0 0.0
        %321 = vmatpush1.msra.mxu0 %v289
        %322 = vmatprep.subr.mxu0 0.0
        %323 = vmatpush1.msra.mxu0 %v290
        %324 = vmatprep.subr.mxu0 0.0
        %325 = vmatpush1.msra.mxu0 %v291
        %326 = vmatprep.subr.mxu0 0.0
        %327 = vmatpush1.msra.mxu0 %v292
        %328 = vmatprep.subr.mxu0 0.0
        %329 = vmatpush1.msra.mxu0 %v293
        %330 = vmatprep.subr.mxu0 0.0
        %331 = vmatpush1.msra.mxu0 %v294
        %332 = vmatprep.subr.mxu0 0.0
        %333 = vmatpush1.msra.mxu0 %v295
        %334 = vmatprep.subr.mxu0 0.0
        %335 = vmatpush1.msra.mxu0 %v296
        %336 = vmatprep.subr.mxu0 0.0
        %337 = vmatpush1.msra.mxu0 0.0
        %338 = vmatprep.subr.mxu0 0.0
        %339 = vmatpush1.msra.mxu0 0.0
        %340 = vmatprep.subr.mxu0 0.0
        %341 = vmatpush1.msra.mxu0 0.0
        %342 = vmatprep.subr.mxu0 0.0
        %343 = vmatpush1.msra.mxu0 0.0
        %344 = vmatprep.subr.mxu0 0.0
        %345 = vmatpush1.msra.mxu0 0.0
        %346 = vmatprep.subr.mxu0 0.0
        %347 = vmatpush1.msra.mxu0 0.0
        %348 = vmatprep.subr.mxu0 0.0
        %349 = vmatpush1.msra.mxu0 0.0
        %350 = vmatprep.subr.mxu0 0.0
        %351 = vmatpush1.msra.mxu0 0.0
        %352 = vmatprep.subr.mxu0 0.0
        %353 = vmatpush1.msra.mxu0 0.0
        %354 = vmatprep.subr.mxu0 0.0
        %355 = vmatpush1.msra.mxu0 0.0
        %356 = vmatprep.subr.mxu0 0.0
        %357 = vmatpush1.msra.mxu0 0.0
        %358 = vmatprep.subr.mxu0 0.0
        %359 = vmatpush1.msra.mxu0 0.0
        %360 = vmatprep.subr.mxu0 0.0
        %361 = vmatpush1.msra.mxu0 0.0
        %362 = vmatprep.subr.mxu0 0.0
        %363 = vmatpush1.msra.mxu0 0.0
        %364 = vmatprep.subr.mxu0 0.0
        %365 = vmatpush1.msra.mxu0 0.0
        %366 = vmatprep.subr.mxu0 0.0
        %367 = vmatpush1.msra.mxu0 0.0
        %368 = vmatprep.mubr.f32.mxu0 0.0
        %369 = vmatmul.mubr.f32.gmra.mrb[0].mxu0 %v280
        %v370 = vpop.f32.mrb[0].mxu0
        %v371 = vadd.f32 %v302, %v370
        %v372 = vpop.f32.mrb[0].mxu0
        %373 = vdwg.mxu0
        %v374 = vmax.f32 %v371, 0.0
        %v375 = vld [vmem:[#allocation5] sm:$0xff]
        %v376 = vld [vmem:[#allocation5 + $0x8] sm:$0xff]
        %v377 = vld [vmem:[#allocation5 + $0x10] sm:$0xff]
        %v378 = vld [vmem:[#allocation5 + $0x18] sm:$0xff]
        %v379 = vld [vmem:[#allocation5 + $0x20] sm:$0xff]
        %v380 = vld [vmem:[#allocation5 + $0x28] sm:$0xff]
        %v381 = vld [vmem:[#allocation5 + $0x30] sm:$0xff]
        %v382 = vld [vmem:[#allocation5 + $0x38] sm:$0xff]
        %v383 = vld [vmem:[#allocation5 + $0x40] sm:$0xff]
        %v384 = vld [vmem:[#allocation5 + $0x48] sm:$0xff]
        %v385 = vld [vmem:[#allocation5 + $0x50] sm:$0xff]
        %v386 = vld [vmem:[#allocation5 + $0x58] sm:$0xff]
        %v387 = vld [vmem:[#allocation5 + $0x60] sm:$0xff]
        %v388 = vld [vmem:[#allocation5 + $0x68] sm:$0xff]
        %v389 = vld [vmem:[#allocation5 + $0x70] sm:$0xff]
        %v390 = vld [vmem:[#allocation5 + $0x78] sm:$0xff]
        %v391 = vld [vmem:[%s4] sm:$0x1]
        %v393 = vlaneseq
        %v394 = vshrl.u32 %v393, 7
        %v395 = vsub.s32 0, %v394
        %v396 = vrot.slane %v391, %v395
        %398 = vmatprep.subr.mxu0 0.0
        %399 = vmatpush1.msra.mxu0 %v375
        %400 = vmatprep.subr.mxu0 0.0
        %401 = vmatpush1.msra.mxu0 %v376
        %402 = vmatprep.subr.mxu0 0.0
        %403 = vmatpush1.msra.mxu0 %v377
        %404 = vmatprep.subr.mxu0 0.0
        %405 = vmatpush1.msra.mxu0 %v378
        %406 = vmatprep.subr.mxu0 0.0
        %407 = vmatpush1.msra.mxu0 %v379
        %408 = vmatprep.subr.mxu0 0.0
        %409 = vmatpush1.msra.mxu0 %v380
        %410 = vmatprep.subr.mxu0 0.0
        %411 = vmatpush1.msra.mxu0 %v381
        %412 = vmatprep.subr.mxu0 0.0
        %413 = vmatpush1.msra.mxu0 %v382
        %414 = vmatprep.subr.mxu0 0.0
        %415 = vmatpush1.msra.mxu0 %v383
        %416 = vmatprep.subr.mxu0 0.0
        %417 = vmatpush1.msra.mxu0 %v384
        %418 = vmatprep.subr.mxu0 0.0
        %419 = vmatpush1.msra.mxu0 %v385
        %420 = vmatprep.subr.mxu0 0.0
        %421 = vmatpush1.msra.mxu0 %v386
        %422 = vmatprep.subr.mxu0 0.0
        %423 = vmatpush1.msra.mxu0 %v387
        %424 = vmatprep.subr.mxu0 0.0
        %425 = vmatpush1.msra.mxu0 %v388
        %426 = vmatprep.subr.mxu0 0.0
        %427 = vmatpush1.msra.mxu0 %v389
        %428 = vmatprep.subr.mxu0 0.0
        %429 = vmatpush1.msra.mxu0 %v390
        %430 = vmatprep.subr.mxu0 0.0
        %431 = vmatpush1.msra.mxu0 0.0
        %432 = vmatprep.subr.mxu0 0.0
        %433 = vmatpush1.msra.mxu0 0.0
        %434 = vmatprep.subr.mxu0 0.0
        %435 = vmatpush1.msra.mxu0 0.0
        %436 = vmatprep.subr.mxu0 0.0
        %437 = vmatpush1.msra.mxu0 0.0
        %438 = vmatprep.subr.mxu0 0.0
        %439 = vmatpush1.msra.mxu0 0.0
        %440 = vmatprep.subr.mxu0 0.0
        %441 = vmatpush1.msra.mxu0 0.0
        %442 = vmatprep.subr.mxu0 0.0
        %443 = vmatpush1.msra.mxu0 0.0
        %444 = vmatprep.subr.mxu0 0.0
        %445 = vmatpush1.msra.mxu0 0.0
        %446 = vmatprep.subr.mxu0 0.0
        %447 = vmatpush1.msra.mxu0 0.0
        %448 = vmatprep.subr.mxu0 0.0
        %449 = vmatpush1.msra.mxu0 0.0
        %450 = vmatprep.subr.mxu0 0.0
        %451 = vmatpush1.msra.mxu0 0.0
        %452 = vmatprep.subr.mxu0 0.0
        %453 = vmatpush1.msra.mxu0 0.0
        %454 = vmatprep.subr.mxu0 0.0
        %455 = vmatpush1.msra.mxu0 0.0
        %456 = vmatprep.subr.mxu0 0.0
        %457 = vmatpush1.msra.mxu0 0.0
        %458 = vmatprep.subr.mxu0 0.0
        %459 = vmatpush1.msra.mxu0 0.0
        %460 = vmatprep.subr.mxu0 0.0
        %461 = vmatpush1.msra.mxu0 0.0
        %462 = vmatprep.mubr.f32.mxu0 0.0
        %463 = vmatmul.mubr.f32.gmra.mrb[0].mxu0 %v374
        %v464 = vpop.f32.mrb[0].mxu0
        %v465 = vadd.f32 %v396, %v464
        %v466 = vpop.f32.mrb[0].mxu0
        %467 = vdwg.mxu0
        %468 = vmax.xlane.f32.xlu0 %v465
        %v469 = vpop.xlane.xlu0 %468
        %v470 = vsub.f32 %v465, %v469
        %v471 = vmul.f32 %v470, 1.442695
        %v472 = vpow.pop %v471
        %473 = vadd.xlane.f32.xlu0 %v472
        %v474 = vpop.xlane.xlu0 %473
        %v475 = vlog2.pop %v474
        %v476 = vmul.f32 %v475, 0.6931472
        %v477 = vsub.f32 %v470, %v476
        %478 = vst [vmem:[%s245] sm:$0xff] %v477
        %s479 = sand.u32 %s139, 1
        %s480 = scalar_lea.sflag [#allocation4], %s479
        %s481 = sand.u32 %s139, 1
        %s482 = smul.addr %s481, 8
        %s483 = scalar_lea.vmem [#allocation7], %s482
        // Predicated region
        $region49: #{cbow_forward.1} parent=39 // pred_check
          %p484 = pneg %p149
        $region50: #{cbow_forward.1} parent=39 // pred_check_branch
          %486 = sbr.rel (%p484) target = $region52
        $region51: #{cbow_forward.1} parent=39 // pred_region
          %s488 = ssub.s32 128, 128
          %489 = vsyncadd %s480, %s488
          %s490 = smul.addr %s21, 128
          %s491 = scalar_lea.hbm %s5, %s490
          %s493 = sshll.u32 %s483, 4
          %s494 = int_to_ptr.vmem [resolvable:$true] %s493
          %496 = dma.vmem_to_hbm [thread:$0]  %s494, 128, %s491, %s480
        $region52: #{cbow_forward.1} parent=39 // pred_fallthru
          _
      $region40: #{cbow_forward.1} parent=5 // pred_fallthru
        _
      %p497 = scmp.le.s32.totalorder 2, %s16
      // Predicated region
      $region53: #{cbow_forward.1} parent=5 // pred_check
        %p498 = pneg %p497
      $region54: #{cbow_forward.1} parent=5 // pred_check_branch
        %500 = sbr.rel (%p498) target = $region56
      $region55: #{cbow_forward.1} parent=5 // pred_region
        %s501 = ssub.s32 %s16, 2
        // Predicated region
        $region57: #{cbow_forward.1} parent=55 // pred_check
          %p502 = pneg %p155
        $region58: #{cbow_forward.1} parent=55 // pred_check_branch
          %504 = sbr.rel (%p502) target = $region60
        $region59: #{cbow_forward.1} parent=55 // pred_region
          %s505 = sand.u32 %s140, 1
          %s506 = scalar_lea.sflag [#allocation4], %s505
          %s507 = sand.u32 %s140, 1
          %s508 = smul.addr %s507, 8
          %s509 = scalar_lea.vmem [#allocation7], %s508
          %510 = dma.done %s506, 128
        $region60: #{cbow_forward.1} parent=55 // pred_fallthru
          _
      $region56: #{cbow_forward.1} parent=5 // pred_fallthru
        _
    $region6: #{cbow_forward.1} parent=1 // loop_footer
      %s20 = sadd.s32 1, %s16
    $region7: #{cbow_forward.1} parent=1 // loop_footer_branch
      %15 = sbr.rel target = $region3
    $region8: #{cbow_forward.1} parent=1 // loop_exit
      _
    %511 = vsyncpa [#allocation3], 1
    %s512 = scalar_lea.sflag [#allocation3], 1
    %513 = vsyncpa %s512, 1
    %514 = vsyncpa [#allocation6], 1
    %515 = vsyncpa [#allocation4], 1
    %s516 = scalar_lea.sflag [#allocation4], 1
    %517 = vsyncpa %s516, 1

</llo_original>
